<compile_context>
chip_gen: v5e
topology: v5e:2x2
jax: 0.10.0
libtpu: 0.0.40
codegen_flags: <defaults>
</compile_context>

<pallas_src>
import functools

import jax
import jax.numpy as jnp
from jax import lax
from jax.experimental import pallas as pl
from jax.experimental.pallas import tpu as pltpu

EPS = 1e-10  # reference: std = max(1.0, eps) == 1.0, so normalization is x - mean.

_MAX_SENTENCES_PER_BLOCK = 8   # cap on the trace-time unroll of the per-sentence loop
_BLOCK_TARGET_BYTES = 1 << 20  # ~1 MiB blocks sit on the HBM-roofline plateau


@functools.lru_cache(maxsize=None)
def _physical_vmem_bytes():
    """Per-TensorCore physical VMEM; conservative 64 MiB (v7x) fallback."""
    try:
        info = pltpu.get_tpu_info()
        cap = getattr(info, "vmem_capacity_bytes", None)
        if cap:
            return int(cap)
    except Exception:
        pass
    return 64 * 1024 * 1024


def _choose_tiles(B, T, F, itemsize):
    """Pick (tb, tf, vmem_limit_bytes) for blocks of shape (tb, T, tf).

    Footprint model: in + out specs, double buffered -> 4 * block bytes.
    """
    phys = _physical_vmem_bytes()
    budget = (phys * 3) // 4  # leave headroom for compiler internals

    # Feature tiling only when the lane dim is 128-aligned AND a single full-F
    # sentence block would blow the budget; otherwise keep the full (possibly
    # unaligned) feature dim -> no HBM pad/slice round trip.
    tf = F
    if 4 * T * F * itemsize > budget and F % 128 == 0:
        for cand in (512, 256, 128):
            if F % cand == 0 and 4 * T * cand * itemsize <= budget:
                tf = cand
                break
    # TODO(synk): time-tiled reduction fallback (grid axis over T marked
    # 'arbitrary', VMEM f32 sum scratch + second subtract sweep) for T so long
    # that even a (1, T, min(F, 128)) block exceeds the VMEM budget.

    # Batch tiling: pack whole sentences per grid step to amortize per-step
    # overhead, keep >= 2 grid points (megacore on v7x), cap the static unroll.
    tb = 1
    if tf == F:
        per_snt = T * F * itemsize
        for cand in range(1, min(B, _MAX_SENTENCES_PER_BLOCK) + 1):
            if B % cand:
                continue
            if 4 * cand * per_snt > budget:
                break
            if B >= 2 and B // cand < 2:
                break
            tb = cand
            if cand * per_snt >= _BLOCK_TARGET_BYTES:
                break

    footprint = 4 * tb * T * tf * itemsize
    vmem_limit = int(min(phys, max(32 << 20, footprint + (8 << 20))))
    return tb, tf, vmem_limit
    # TODO(synk): for tiny per-step blocks a 3-deep pipeline
    # (pipeline_mode=pl.Buffered(3)) would hide DMA issue latency further.


def _sentence_norm_kernel(actual_ref, x_ref, o_ref, *, tb):
    """One (sentence-tile, feature-tile) grid point.

    actual_ref : SMEM int32 [B]      valid-frame counts (scalar prefetch)
    x_ref      : VMEM [tb, T, TF]    tb sentences, one feature tile
    o_ref      : VMEM [tb, T, TF]
    """
    b0 = pl.program_id(0) * tb
    T = x_ref.shape[1]
    t_idx = lax.broadcasted_iota(jnp.int32, (T, 1), 0)  # hoisted out of the loop

    for i in range(tb):                                  # small static unroll
        n = actual_ref[b0 + i]                           # valid frames (scalar)
        x = x_ref[i]                                     # (T, TF)
        xf = x.astype(jnp.float32)                       # stats in f32
        masked = jnp.where(t_idx < n, xf, 0.0)           # select, no int->f32 mul
        # NOTE: zero-length sentences clamp the denom to 1 (mean = 0) instead of
        # the reference's NaN-producing empty-slice mean (intentional divergence).
        denom = jnp.maximum(n, 1).astype(jnp.float32)
        mean = jnp.sum(masked, axis=0, keepdims=True) / denom   # (1, TF)
        # std == max(1.0, eps) == 1.0 in the reference -> no divide needed.
        # Subtract in the input dtype (bf16 stays bf16 on the elementwise pass).
        o_ref[i] = (x - mean.astype(x.dtype)).astype(o_ref.dtype)


@jax.jit
def _sentence_normalize(x, lengths):
    B, T, F = x.shape
    # round(lengths * T), clamped to [0, T] (the reference slice clamps the same
    # way, and its mean then divides by at most T frames).
    actual_size = jnp.clip(jnp.round(lengths * T), 0, T).astype(jnp.int32)

    tb, tf, vmem_limit = _choose_tiles(B, T, F, jnp.dtype(x.dtype).itemsize)
    grid = (B // tb, F // tf)

    grid_spec = pltpu.PrefetchScalarGridSpec(
        num_scalar_prefetch=1,                      # actual_size -> SMEM
        grid=grid,
        in_specs=[
            pl.BlockSpec((tb, T, tf), lambda b, f, actual: (b, 0, f)),
        ],
        out_specs=pl.BlockSpec((tb, T, tf), lambda b, f, actual: (b, 0, f)),
    )

    return pl.pallas_call(
        functools.partial(_sentence_norm_kernel, tb=tb),
        out_shape=jax.ShapeDtypeStruct((B, T, F), x.dtype),
        grid_spec=grid_spec,
        compiler_params=pltpu.CompilerParams(
            dimension_semantics=("parallel", "parallel"),
            vmem_limit_bytes=vmem_limit,
        ),
    )(actual_size, x)


def input_normalization(x, lengths, *, mean_norm=True, norm_type="sentence"):
    """JAX/Pallas port of InputNormalization.forward.

    x:        [B, T, F]  float32 / bfloat16
    lengths:  [B]        relative lengths in (0, 1]
    """
    if norm_type != "sentence":
        # 'global' / 'batch' / 'speaker': the reference forward returns x
        # unchanged (it only mutates x in the 'sentence' branch).
        # TODO(synk): moving-average glob_mean/glob_std/spk_dict_* bookkeeping is
        # Python-side module state in the reference and does not affect the
        # returned tensor.
        return x
    if not mean_norm:
        # mean = 0, std = max(1, eps) = 1 -> identity; skip the HBM round trip.
        return x
    return _sentence_normalize(x, lengths)


def _reference(x, lengths, *, mean_norm=True, norm_type="sentence"):
    """Pure-JAX reference mirroring the PyTorch/MLX forward."""
    B, T, F = x.shape
    if norm_type != "sentence":
        return x
    out = []
    for b in range(B):
        n = int(jnp.round(lengths[b] * T))
        if mean_norm:
            mean = jnp.mean(x[b, :n, :].astype(jnp.float32), axis=0)
        else:
            mean = jnp.zeros((F,), jnp.float32)
        std = jnp.maximum(jnp.float32(1.0), jnp.float32(EPS))
        out.append(((x[b].astype(jnp.float32) - mean) / std).astype(x.dtype))
    return jnp.stack(out, axis=0)


if __name__ == "__main__":
    key = jax.random.PRNGKey(0)
    k1, k2 = jax.random.split(key)

    # Case 1: small feature dim (F < 128 exercises the full-F, masked-store path;
    # batch tiling packs 2 sentences per block).
    B, T, F = 4, 16, 32
    x = jax.random.normal(k1, (B, T, F), dtype=jnp.float32)
    lengths = jnp.array([0.75, 1.0, 0.5, 1.0], dtype=jnp.float32)

    y = input_normalization(x, lengths, mean_norm=True, norm_type="sentence")
    y = jax.block_until_ready(y)
    y_ref = _reference(x, lengths, mean_norm=True, norm_type="sentence")
    assert y.shape == x.shape and y.dtype == x.dtype
    assert jnp.allclose(y, y_ref, atol=1e-5, rtol=1e-5), "mismatch vs reference (case 1)"

    # 'global' (module default) is a pass-through in the reference forward.
    y_glob = input_normalization(x, lengths, norm_type="global")
    assert jnp.array_equal(jax.block_until_ready(y_glob), x)

    # mean_norm=False -> identity (mean = 0, std = 1).
    y_id = jax.block_until_ready(
        input_normalization(x, lengths, mean_norm=False, norm_type="sentence"))
    assert jnp.allclose(y_id, x)

    # Case 2: lane-aligned feature dim (F % 128 == 0, unmasked lane-dense stores).
    B2, T2, F2 = 2, 24, 256
    x2 = jax.random.normal(k2, (B2, T2, F2), dtype=jnp.float32)
    lengths2 = jnp.array([1.0, 0.5], dtype=jnp.float32)
    y2 = jax.block_until_ready(
        input_normalization(x2, lengths2, mean_norm=True, norm_type="sentence"))
    y2_ref = _reference(x2, lengths2, mean_norm=True, norm_type="sentence")
    assert jnp.allclose(y2, y2_ref, atol=1e-5, rtol=1e-5), "mismatch vs reference (case 2)"

    print("KERNEL_OK")
</pallas_src>

<mosaic_0001>
module attributes {stable_mosaic.version = 11 : i64} {
  func.func @_sentence_norm_kernel(%arg0: i32, %arg1: i32, %arg2: memref<4xi32, #tpu.memory_space<smem>>, %arg3: memref<2x16x32xf32, #tpu.memory_space<vmem>>, %arg4: memref<2x16x32xf32, #tpu.memory_space<vmem>>) attributes {dimension_semantics = [#tpu.dimension_semantics<parallel>, #tpu.dimension_semantics<parallel>], iteration_bounds = array<i64: 2, 1>, scalar_prefetch = 1 : i64, scratch_operands = 0 : i64, tpu.core_type = #tpu.core_type<tc>, window_params = [{transform_indices = @transform_0, window_bounds = array<i64: 2, 16, 32>}, {transform_indices = @transform_1, window_bounds = array<i64: 2, 16, 32>}]} {
    %c2_i32 = arith.constant 2 : i32
    %0 = arith.muli %arg0, %c2_i32 : i32
    %1 = tpu.iota {dimensions = array<i32: 0>} : vector<16x1xi32>
    %c0_i32 = arith.constant 0 : i32
    %2 = arith.addi %0, %c0_i32 : i32
    %3 = arith.index_cast %2 : i32 to index
    %4 = memref.load %arg2[%3] : memref<4xi32, #tpu.memory_space<smem>>
    %c0 = arith.constant 0 : index
    %c0_0 = arith.constant 0 : index
    %c0_1 = arith.constant 0 : index
    %5 = vector.load %arg3[%c0, %c0_0, %c0_1] : memref<2x16x32xf32, #tpu.memory_space<vmem>>, vector<1x16x32xf32>
    %6 = vector.shape_cast %5 : vector<1x16x32xf32> to vector<16x32xf32>
    %7 = vector.broadcast %4 : i32 to vector<16x1xi32>
    %8 = arith.cmpi slt, %1, %7 : vector<16x1xi32>
    %cst = arith.constant 0.000000e+00 : f32
    %9 = vector.shape_cast %8 : vector<16x1xi1> to vector<16x1xi1>
    %10 = vector.broadcast %9 : vector<16x1xi1> to vector<16x32xi1>
    %11 = vector.broadcast %cst : f32 to vector<16x32xf32>
    %12 = arith.select %10, %6, %11 : vector<16x32xi1>, vector<16x32xf32>
    %c1_i32 = arith.constant 1 : i32
    %13 = arith.maxsi %4, %c1_i32 : i32
    %14 = arith.sitofp %13 : i32 to f32
    %cst_2 = arith.constant dense<0.000000e+00> : vector<32xf32>
    %15 = vector.multi_reduction <add>, %12, %cst_2 [0] : vector<16x32xf32> to vector<32xf32>
    %16 = vector.shape_cast %15 : vector<32xf32> to vector<1x32xf32>
    %17 = vector.broadcast %14 : f32 to vector<1x32xf32>
    %18 = arith.divf %16, %17 : vector<1x32xf32>
    %19 = vector.broadcast %18 : vector<1x32xf32> to vector<16x32xf32>
    %20 = arith.subf %6, %19 : vector<16x32xf32>
    %c0_3 = arith.constant 0 : index
    %c0_4 = arith.constant 0 : index
    %c0_5 = arith.constant 0 : index
    %21 = vector.load %arg4[%c0_3, %c0_4, %c0_5] : memref<2x16x32xf32, #tpu.memory_space<vmem>>, vector<1x16x32xf32>
    %22 = vector.shape_cast %21 : vector<1x16x32xf32> to vector<16x32xf32>
    %23 = vector.shape_cast %20 : vector<16x32xf32> to vector<1x16x32xf32>
    tpu.vector_store %arg4[%c0_3, %c0_4, %c0_5], %23 {strides = array<i32>} : memref<2x16x32xf32, #tpu.memory_space<vmem>>, vector<1x16x32xf32>,
    %c1_i32_6 = arith.constant 1 : i32
    %24 = arith.addi %0, %c1_i32_6 : i32
    %25 = arith.index_cast %24 : i32 to index
    %26 = memref.load %arg2[%25] : memref<4xi32, #tpu.memory_space<smem>>
    %c1 = arith.constant 1 : index
    %c0_7 = arith.constant 0 : index
    %c0_8 = arith.constant 0 : index
    %27 = vector.load %arg3[%c1, %c0_7, %c0_8] : memref<2x16x32xf32, #tpu.memory_space<vmem>>, vector<1x16x32xf32>
    %28 = vector.shape_cast %27 : vector<1x16x32xf32> to vector<16x32xf32>
    %29 = vector.broadcast %26 : i32 to vector<16x1xi32>
    %30 = arith.cmpi slt, %1, %29 : vector<16x1xi32>
    %cst_9 = arith.constant 0.000000e+00 : f32
    %31 = vector.shape_cast %30 : vector<16x1xi1> to vector<16x1xi1>
    %32 = vector.broadcast %31 : vector<16x1xi1> to vector<16x32xi1>
    %33 = vector.broadcast %cst_9 : f32 to vector<16x32xf32>
    %34 = arith.select %32, %28, %33 : vector<16x32xi1>, vector<16x32xf32>
    %c1_i32_10 = arith.constant 1 : i32
    %35 = arith.maxsi %26, %c1_i32_10 : i32
    %36 = arith.sitofp %35 : i32 to f32
    %cst_11 = arith.constant dense<0.000000e+00> : vector<32xf32>
    %37 = vector.multi_reduction <add>, %34, %cst_11 [0] : vector<16x32xf32> to vector<32xf32>
    %38 = vector.shape_cast %37 : vector<32xf32> to vector<1x32xf32>
    %39 = vector.broadcast %36 : f32 to vector<1x32xf32>
    %40 = arith.divf %38, %39 : vector<1x32xf32>
    %41 = vector.broadcast %40 : vector<1x32xf32> to vector<16x32xf32>
    %42 = arith.subf %28, %41 : vector<16x32xf32>
    %c1_12 = arith.constant 1 : index
    %c0_13 = arith.constant 0 : index
    %c0_14 = arith.constant 0 : index
    %43 = vector.load %arg4[%c1_12, %c0_13, %c0_14] : memref<2x16x32xf32, #tpu.memory_space<vmem>>, vector<1x16x32xf32>
    %44 = vector.shape_cast %43 : vector<1x16x32xf32> to vector<16x32xf32>
    %45 = vector.shape_cast %42 : vector<16x32xf32> to vector<1x16x32xf32>
    tpu.vector_store %arg4[%c1_12, %c0_13, %c0_14], %45 {strides = array<i32>} : memref<2x16x32xf32, #tpu.memory_space<vmem>>, vector<1x16x32xf32>,
    return
  }
  func.func @transform_0(%arg0: i32, %arg1: i32, %arg2: memref<4xi32, #tpu.memory_space<smem>>) -> (i32, i32, i32) {
    %c0_i32 = arith.constant 0 : i32
    %c0_i32_0 = arith.constant 0 : i32
    return %arg0, %c0_i32, %arg1 : i32, i32, i32
  }
  func.func @transform_1(%arg0: i32, %arg1: i32, %arg2: memref<4xi32, #tpu.memory_space<smem>>) -> (i32, i32, i32) {
    %c0_i32 = arith.constant 0 : i32
    %c0_i32_0 = arith.constant 0 : i32
    return %arg0, %c0_i32, %arg1 : i32, i32, i32
  }
}

</mosaic_0001>

<llo_original>
// kernel: _sentence_normalize.1
$region0: #{_sentence_normalize.1}
  #allocation0 [shape = 'u32[]', space=smem, size = 0x4, offset = 0x4, fixed_abs, tag = 'smem constant byte address 0x4 - core index']
  #allocation1 [shape = 'u32[72,128]{1,0:T(1,128)}', space=vmem, size = 0x9000, scoped, tag = 'internal scratch']
  #allocation2 [shape = 's32[1]{0}', space=sflag, size = 0x4, scoped, tag = 'scoped memory for _sentence_normalize.1']
  #allocation3 [shape = 'u8[512]{0}', space=smem, size = 0x200, scoped, tag = 'prefetched SMEM operand 0']
  %s0 = inlined_call_operand.vmem [shape: s32[4], index: 0, kind: input, shape index: {}]
  %s1 = inlined_call_operand.hbm [shape: f32[4,16,32], index: 1, kind: input, shape index: {}]
  %s2 = inlined_call_operand.hbm [shape: f32[4,16,32], index: 2, kind: output, shape index: {}]
  %s3 = sld [smem:[#allocation0]]
  $region41: #{_sentence_normalize.1} parent=0
    _
  %s5 = ssub.s32 1, %s3
  %s6 = scalar_select 0, %s5, %s3
  %s8 = sshll.u32 %s0, 4
  %s9 = int_to_ptr.vmem [resolvable:$true] %s8
  %11 = dma.vmem_to_smem %s9, 16, [#allocation3], [#allocation2]
  %13 = dma.done [#allocation2], 16
  %14 = sfence
  $region1: #{_sentence_normalize.1} parent=0
    #allocation4 [shape = 'u8[32768]{0}', space=vmem, size = 0x8000, scoped, tag = 'input window, operand 1']
    #allocation5 [shape = 's32[2]{0}', space=sflag, size = 0x8, scoped, tag = 'scoped memory for _sentence_normalize.1']
    #allocation6 [shape = 's32[2]{0}', space=sflag, size = 0x8, scoped, tag = 'scoped memory for _sentence_normalize.1']
    #allocation7 [shape = 'u8[32768]{0}', space=vmem, size = 0x8000, scoped, tag = 'output window, operand 0']
    %15 = vsyncpa [#allocation5], 0
    %s16 = scalar_lea.sflag [#allocation5], 1
    %17 = vsyncpa %s16, 0
    %18 = vsyncpa [#allocation6], 0
    %s19 = scalar_lea.sflag [#allocation6], 1
    %20 = vsyncpa %s19, 0
    loop: start=0, step=1, limit=4
    $region2: #{_sentence_normalize.1} parent=1 // loop_pre_header
      _
    $region3: #{_sentence_normalize.1} parent=1 // loop_header
      %s22 = sphi 0, %s26
      %p23 = scmp.ge.s32.totalorder %s22, 4
      %s29 = sphi 0, %s41
      %s30 = sphi 0, %s37
      %s31 = sphi 0, %s29
      %s32 = sphi 0, %s30
      %s33 = sphi 0, %s31
      %s34 = sphi 0, %s32
      %s46 = sphi 0, %s48
      %s49 = sphi 0, %s46
      %s50 = sphi 0, %s49
      %s66 = sphi 0, %s50
      %s74 = sphi 0, %s76
      %s77 = sphi 0, %s74
      %s78 = sphi 0, %s77
      %s94 = sphi 0, %s78
    $region4: #{_sentence_normalize.1} parent=1 // loop_header_branch
      %25 = sbr.rel (%p23) target = $region8
    $region5: #{_sentence_normalize.1} parent=1 // loop_body
      %s27 = ssub.s32 %s22, 1
      %s28 = ssub.s32 %s22, 2
      %s35 = sadd.s32 1, %s30
      %p36 = scmp.ge.s32.totalorder %s35, 1
      %s37 = scalar_select %p36, 0, %s35
      %s38 = sadd.s32 1, %s29
      %s39 = scalar_select %p36, %s38, %s29
      %p40 = scmp.ge.s32.totalorder %s39, 2
      %s41 = scalar_select %p40, 0, %s39
      %s42 = ssub.s32 %s29, %s41
      %s43 = ssub.s32 %s30, %s37
      %s44 = sor.u32 %s42, %s43
      %p45 = scmp.eq.s32.totalorder %s44, 0
      %s47 = sadd.s32 %s46, 1
      %s48 = scalar_select %p45, %s46, %s47
      %p51 = pneg %p45
      %p52 = scmp.eq.s32.totalorder %s22, 1
      %p53 = por %p51, %p52
      %p54 = scmp.ne.s32.totalorder %s46, %s49
      %p55 = scmp.eq.s32.totalorder %s22, 0
      %p56 = por %p54, %p55
      %p57 = scmp.ne.s32.totalorder %s46, %s49
      %p58 = scmp.eq.s32.totalorder %s27, 1
      %p59 = por %p57, %p58
      %p60 = scmp.ne.s32.totalorder %s49, %s50
      %p61 = scmp.eq.s32.totalorder %s27, 0
      %p62 = por %p60, %p61
      %p63 = scmp.ne.s32.totalorder %s49, %s50
      %p64 = scmp.eq.s32.totalorder %s28, 1
      %p65 = por %p63, %p64
      %p67 = scmp.ne.s32.totalorder %s50, %s66
      %p68 = scmp.eq.s32.totalorder %s28, 0
      %p69 = por %p67, %p68
      %s70 = ssub.s32 %s29, %s41
      %s71 = ssub.s32 %s30, %s37
      %s72 = sor.u32 %s70, %s71
      %p73 = scmp.eq.s32.totalorder %s72, 0
      %s75 = sadd.s32 %s74, 1
      %s76 = scalar_select %p73, %s74, %s75
      %p79 = pneg %p73
      %p80 = scmp.eq.s32.totalorder %s22, 1
      %p81 = por %p79, %p80
      %p82 = scmp.ne.s32.totalorder %s74, %s77
      %p83 = scmp.eq.s32.totalorder %s22, 0
      %p84 = por %p82, %p83
      %p85 = scmp.ne.s32.totalorder %s74, %s77
      %p86 = scmp.eq.s32.totalorder %s27, 1
      %p87 = por %p85, %p86
      %p88 = scmp.ne.s32.totalorder %s77, %s78
      %p89 = scmp.eq.s32.totalorder %s27, 0
      %p90 = por %p88, %p89
      %p91 = scmp.ne.s32.totalorder %s77, %s78
      %p92 = scmp.eq.s32.totalorder %s28, 1
      %p93 = por %p91, %p92
      %p95 = scmp.ne.s32.totalorder %s78, %s94
      %p96 = scmp.eq.s32.totalorder %s28, 0
      %p97 = por %p95, %p96
      %p98 = scmp.le.s32.totalorder 1, %s22
      %p99 = scmp.lt.s32.totalorder %s22, 3
      %p100 = pnand %p98, %p99
      %p101 = pneg %p100
      // Predicated region
      $region9: #{_sentence_normalize.1} parent=5 // pred_check
        _
      $region10: #{_sentence_normalize.1} parent=5 // pred_check_branch
        %103 = sbr.rel (%p100) target = $region12
      $region11: #{_sentence_normalize.1} parent=5 // pred_region
        %s104 = ssub.s32 %s22, 1
      $region12: #{_sentence_normalize.1} parent=5 // pred_fallthru
        _
      %p105 = scmp.lt.s32.totalorder %s22, 2
      // Predicated region
      $region13: #{_sentence_normalize.1} parent=5 // pred_check
        %p106 = pneg %p105
      $region14: #{_sentence_normalize.1} parent=5 // pred_check_branch
        %108 = sbr.rel (%p106) target = $region16
      $region15: #{_sentence_normalize.1} parent=5 // pred_region
        // Predicated region
        $region17: #{_sentence_normalize.1} parent=15 // pred_check
          %p109 = pneg %p56
        $region18: #{_sentence_normalize.1} parent=15 // pred_check_branch
          %111 = sbr.rel (%p109) target = $region20
        $region19: #{_sentence_normalize.1} parent=15 // pred_region
          %s112 = sand.u32 %s46, 1
          %s113 = scalar_lea.sflag [#allocation5], %s112
          %s114 = sand.u32 %s46, 1
          %s115 = smul.addr %s114, 32
          %s116 = scalar_lea.vmem [#allocation4], %s115
          %s117 = smul.u32 2, %s29
          %119 = vsyncadd %s113, 0
          %s120 = smul.addr %s117, 2
          %s121 = sadd.s32 %s30, %s120
          %s122 = smul.addr %s121, 8
          %s123 = scalar_lea.hbm %s1, %s122
          %s124 = sshll.u32 %s123, 4
          %s125 = int_to_ptr.hbm [resolvable:$true] %s124
          %s126 = sshll.u32 %s116, 4
          %s127 = int_to_ptr.vmem [resolvable:$true] %s126
          %132 = dma.hbm_to_vmem [thread:$0]  %s125, 512, %s127, %s113, 128, 128, 8
        $region20: #{_sentence_normalize.1} parent=15 // pred_fallthru
          _
      $region16: #{_sentence_normalize.1} parent=5 // pred_fallthru
        _
      %p133 = scmp.le.s32.totalorder 1, %s22
      %p134 = scmp.lt.s32.totalorder %s22, 3
      %p135 = pnand %p133, %p134
      %p136 = pneg %p135
      // Predicated region
      $region21: #{_sentence_normalize.1} parent=5 // pred_check
        _
      $region22: #{_sentence_normalize.1} parent=5 // pred_check_branch
        %138 = sbr.rel (%p135) target = $region24
      $region23: #{_sentence_normalize.1} parent=5 // pred_region
        %s139 = ssub.s32 %s22, 1
        %s140 = sand.u32 %s49, 1
        %s141 = scalar_lea.sflag [#allocation5], %s140
        %s142 = sand.u32 %s49, 1
        %s143 = smul.addr %s142, 32
        %s144 = scalar_lea.vmem [#allocation4], %s143
        // Predicated region
        $region25: #{_sentence_normalize.1} parent=23 // pred_check
          %p145 = pneg %p62
        $region26: #{_sentence_normalize.1} parent=23 // pred_check_branch
          %147 = sbr.rel (%p145) target = $region28
        $region27: #{_sentence_normalize.1} parent=23 // pred_region
          %149 = dma.done %s141, 512
        $region28: #{_sentence_normalize.1} parent=23 // pred_fallthru
          _
        %s150 = sand.u32 %s49, 1
        %s151 = scalar_lea.sflag [#allocation5], %s150
        %s152 = sand.u32 %s49, 1
        %s153 = smul.addr %s152, 32
        %s154 = scalar_lea.vmem [#allocation4], %s153
        %p155 = pneg %p62
        %p156 = pneg %p59
        %p157 = pneg %p90
        %p158 = pneg %p87
        %s159 = sand.u32 %s77, 1
        %s160 = scalar_lea.sflag [#allocation6], %s159
        %s161 = sand.u32 %s77, 1
        %s162 = smul.addr %s161, 32
        %s163 = scalar_lea.vmem [#allocation7], %s162
        %s164 = smul.u32 2, %s31
        %s165 = smul.u32 2, %s31
        %s166 = smul.u32 %s31, 2
        %v167 = vlaneseq
        %v168 = vshrl.u32 %v167, 7
        %v169 = vadd.s32 %v168, 8
        %s170 = sld [smem:[#allocation3 + %s166]]
        %v171 = vld [vmem:[%s144] sm:$0xff]
        %v172 = vld [vmem:[%s144 + $0x8] sm:$0xff]
        %v173 = vstv %s170
        %vm174 = vcmp.lt.s32.totalorder %v168, %v173
        %vm175 = vcmp.lt.s32.totalorder %v169, %v173
        %v176 = vsel %vm174, 1, 0
        %v177 = vsel %vm175, 1, 0
        %vm178 = vcmp.eq.s32.totalorder %v176, 1
        %vm179 = vcmp.eq.s32.totalorder %v177, 1
        %v180 = vsel %vm178, %v171, 0.0
        %v181 = vsel %vm179, %v172, 0.0
        %p182 = scmp.gt.s32.totalorder %s170, 1
        %s183 = scalar_select %p182, %s170, 1
        %s184 = scvt.s32.f32 %s183
        %vm185 = vcmask 261120
        %v186 = vsel %vm185, %v180, 0.0
        %v187 = vsel %vm185, %v181, 0.0
        %v188 = vadd.f32 %v186, %v187
        %v189 = vrot.slane %v188, 4
        %v190 = vadd.f32 %v188, %v189
        %v191 = vrot.slane %v190, 2
        %v192 = vadd.f32 %v190, %v191
        %v193 = vrot.slane %v192, 1
        %v194 = vadd.f32 %v192, %v193
        %v195 = vstv %s184
        %v196 = vrcp.pop %v195
        %v197 = vmul.f32 %v195, %v196
        %v198 = vsub.f32 1.0, %v197
        %v199 = vmul.f32 %v196, %v198
        %v200 = vadd.f32 %v196, %v199
        %vm201 = vweird.f32 %v195
        %vm202 = vweird.f32 %v196
        %vm203 = vmor %vm201, %vm202
        %v204 = vsel %vm203, %v196, %v200
        %v205 = vand.u32 2147483647, %v195
        %vm206 = vcmp.eq.f32.partialorder %v205, 8.507059e+37
        %v207 = vand.u32 %v195, 2147483648
        %v208 = vor.u32 1.1754944e-38, %v207
        %v209 = vsel %vm206, %v208, %v204
        %v210 = vmul.f32 %v194, %v209
        %v211 = vsub.f32 %v171, %v210
        %v212 = vsub.f32 %v172, %v210
        %213 = vst.msk [vmem:[%s163] sm:$0xff] %vm185, %v211
        %214 = vst.msk [vmem:[%s163 + $0x8] sm:$0xff] %vm185, %v212
        %s215 = sadd.s32 %s166, 1
        %s216 = sld [smem:[#allocation3 + %s215]]
        %s217 = scalar_lea.vmem %s144, 16 [#allocation4]
        %v218 = vld [vmem:[%s217] sm:$0xff]
        %v219 = vld [vmem:[%s217 + $0x8] sm:$0xff]
        %v220 = vstv %s216
        %vm221 = vcmp.lt.s32.totalorder %v168, %v220
        %vm222 = vcmp.lt.s32.totalorder %v169, %v220
        %v223 = vsel %vm221, 1, 0
        %v224 = vsel %vm222, 1, 0
        %vm225 = vcmp.eq.s32.totalorder %v223, 1
        %vm226 = vcmp.eq.s32.totalorder %v224, 1
        %v227 = vsel %vm225, %v218, 0.0
        %v228 = vsel %vm226, %v219, 0.0
        %p229 = scmp.gt.s32.totalorder %s216, 1
        %s230 = scalar_select %p229, %s216, 1
        %s231 = scvt.s32.f32 %s230
        %v232 = vsel %vm185, %v227, 0.0
        %v233 = vsel %vm185, %v228, 0.0
        %v234 = vadd.f32 %v232, %v233
        %v235 = vrot.slane %v234, 4
        %v236 = vadd.f32 %v234, %v235
        %v237 = vrot.slane %v236, 2
        %v238 = vadd.f32 %v236, %v237
        %v239 = vrot.slane %v238, 1
        %v240 = vadd.f32 %v238, %v239
        %v241 = vstv %s231
        %v242 = vrcp.pop %v241
        %v243 = vmul.f32 %v241, %v242
        %v244 = vsub.f32 1.0, %v243
        %v245 = vmul.f32 %v242, %v244
        %v246 = vadd.f32 %v242, %v245
        %vm247 = vweird.f32 %v241
        %vm248 = vweird.f32 %v242
        %vm249 = vmor %vm247, %vm248
        %v250 = vsel %vm249, %v242, %v246
        %v251 = vand.u32 2147483647, %v241
        %vm252 = vcmp.eq.f32.partialorder %v251, 8.507059e+37
        %v253 = vand.u32 %v241, 2147483648
        %v254 = vor.u32 1.1754944e-38, %v253
        %v255 = vsel %vm252, %v254, %v250
        %v256 = vmul.f32 %v240, %v255
        %v257 = vsub.f32 %v218, %v256
        %v258 = vsub.f32 %v219, %v256
        %s259 = scalar_lea.vmem %s163, 16 [#allocation7]
        %260 = vst.msk [vmem:[%s259] sm:$0xff] %vm185, %v257
        %261 = vst.msk [vmem:[%s259 + $0x8] sm:$0xff] %vm185, %v258
        %s262 = sand.u32 %s77, 1
        %s263 = scalar_lea.sflag [#allocation6], %s262
        %s264 = sand.u32 %s77, 1
        %s265 = smul.addr %s264, 32
        %s266 = scalar_lea.vmem [#allocation7], %s265
        // Predicated region
        $region29: #{_sentence_normalize.1} parent=23 // pred_check
          %p267 = pneg %p87
        $region30: #{_sentence_normalize.1} parent=23 // pred_check_branch
          %269 = sbr.rel (%p267) target = $region32
        $region31: #{_sentence_normalize.1} parent=23 // pred_region
          %s270 = smul.u32 2, %s31
          %272 = vsyncadd %s263, 0
          %s273 = smul.addr %s270, 2
          %s274 = sadd.s32 %s32, %s273
          %s275 = smul.addr %s274, 8
          %s276 = scalar_lea.hbm %s2, %s275
          %s277 = sshll.u32 %s266, 4
          %s278 = int_to_ptr.vmem [resolvable:$true] %s277
          %s279 = sshll.u32 %s276, 4
          %s280 = int_to_ptr.hbm [resolvable:$true] %s279
          %285 = dma.vmem_to_hbm [thread:$0]  %s278, 512, %s280, %s263, 128, 128, 8
        $region32: #{_sentence_normalize.1} parent=23 // pred_fallthru
          _
      $region24: #{_sentence_normalize.1} parent=5 // pred_fallthru
        _
      %p286 = scmp.le.s32.totalorder 2, %s22
      // Predicated region
      $region33: #{_sentence_normalize.1} parent=5 // pred_check
        %p287 = pneg %p286
      $region34: #{_sentence_normalize.1} parent=5 // pred_check_branch
        %289 = sbr.rel (%p287) target = $region36
      $region35: #{_sentence_normalize.1} parent=5 // pred_region
        %s290 = ssub.s32 %s22, 2
        // Predicated region
        $region37: #{_sentence_normalize.1} parent=35 // pred_check
          %p291 = pneg %p93
        $region38: #{_sentence_normalize.1} parent=35 // pred_check_branch
          %293 = sbr.rel (%p291) target = $region40
        $region39: #{_sentence_normalize.1} parent=35 // pred_region
          %s294 = sand.u32 %s78, 1
          %s295 = scalar_lea.sflag [#allocation6], %s294
          %s296 = sand.u32 %s78, 1
          %s297 = smul.addr %s296, 32
          %s298 = scalar_lea.vmem [#allocation7], %s297
          %300 = dma.done %s295, 512
        $region40: #{_sentence_normalize.1} parent=35 // pred_fallthru
          _
      $region36: #{_sentence_normalize.1} parent=5 // pred_fallthru
        _
    $region6: #{_sentence_normalize.1} parent=1 // loop_footer
      %s26 = sadd.s32 1, %s22
    $region7: #{_sentence_normalize.1} parent=1 // loop_footer_branch
      %21 = sbr.rel target = $region3
    $region8: #{_sentence_normalize.1} parent=1 // loop_exit
      _
    %301 = vsyncpa [#allocation5], 1
    %s302 = scalar_lea.sflag [#allocation5], 1
    %303 = vsyncpa %s302, 1
    %304 = vsyncpa [#allocation6], 1
    %s305 = scalar_lea.sflag [#allocation6], 1
    %306 = vsyncpa %s305, 1

</llo_original>
